<compile_context>
chip_gen: v7x
topology: tpu7x:2x2x1
jax: 0.10.0
libtpu: 0.0.40
codegen_flags: <defaults>
</compile_context>

<pallas_src>
import jax
import jax.numpy as jnp
import numpy as np
from jax.experimental import pallas as pl

# ---- ParlConfig (small synthetic values) ------------------------------------
WORD_DIM       = 8     # config.word_dim
KERNEL_NUM     = 8     # config.kernel_num
KERNEL_WIDTH   = 3     # config.kernel_width
REVIEW_LENGTH  = 16    # config.review_length
LATENT_FACTORS = 8     # config.latent_factors
BATCH          = 2

PAD = KERNEL_WIDTH // 2
L1  = REVIEW_LENGTH + 2 * PAD - KERNEL_WIDTH + 1     # init_conv output length (== L for odd kw)
L2  = L1 - KERNEL_WIDTH + 1                          # abstract_conv output length

# packed-weight row offsets (all multiples of 8 -> sublane-aligned slices)
R1 = KERNEL_WIDTH * WORD_DIM            # end of w1 (im2col)        : 24
R2 = R1 + KERNEL_WIDTH * KERNEL_NUM     # end of w2 (im2col)        : 48
R3 = R2 + KERNEL_NUM                    # end of aux_linear weight  : 56
R4 = R3 + LATENT_FACTORS                # end of high_linear weight : 64
R5 = R4 + LATENT_FACTORS                # end of gate weight        : 72
CW = max(KERNEL_NUM, LATENT_FACTORS)    # packed column width


def aux_kernel(xt_ref, w_ref, b_ref, out_ref):
    # xt_ref: (B, L1, KW*WORD_DIM)  im2col'd, zero-padded input (whole batch)
    # w_ref : (R5, CW)              packed weights
    # b_ref : (8, CW)               packed biases (rows 0..4 used)
    B = xt_ref.shape[0]

    # ---- init_conv + relu: single (B*L1, KW*D) @ (KW*D, KN) matmul -----------
    t1 = xt_ref[...].reshape(B * L1, KERNEL_WIDTH * WORD_DIM)
    o1 = jnp.dot(t1, w_ref[0:R1, 0:KERNEL_NUM])
    out1 = jnp.maximum(o1 + b_ref[0:1, 0:KERNEL_NUM], 0.0)          # (B*L1, KN)
    out1 = out1.reshape(B, L1, KERNEL_NUM)                          # dropout = identity

    # ---- abstract_conv + relu (im2col in-kernel, one matmul) -----------------
    # Windows run past the end of out1 for the last KW-1 positions; those
    # positions are computed on zero padding and masked to 0 before the max
    # (exact, since every valid relu output is >= 0).
    zpad = jnp.zeros((B, KERNEL_WIDTH - 1, KERNEL_NUM), jnp.float32)
    out1e = jnp.concatenate([out1, zpad], axis=1)                   # (B, L1+KW-1, KN)
    taps2 = jnp.concatenate(
        [out1e[:, k:k + L1, :] for k in range(KERNEL_WIDTH)], axis=-1)  # (B, L1, KW*KN)
    t2 = taps2.reshape(B * L1, KERNEL_WIDTH * KERNEL_NUM)
    o2 = jnp.dot(t2, w_ref[R1:R2, 0:KERNEL_NUM])
    out2 = jnp.maximum(o2 + b_ref[1:2, 0:KERNEL_NUM], 0.0)          # (B*L1, KN)
    out2 = out2.reshape(B, L1, KERNEL_NUM)                          # dropout = identity

    # ---- MaxPool1d over the full valid length (kernel_size = L - kw + 1) -----
    pos = jax.lax.broadcasted_iota(jnp.int32, (B, L1, KERNEL_NUM), 1)
    q_abs = jnp.max(jnp.where(pos < L2, out2, 0.0), axis=1)         # (B, KN)

    # ---- aux_linear + relu ----------------------------------------------------
    q_aux = jnp.maximum(
        jnp.dot(q_abs, w_ref[R2:R3, 0:LATENT_FACTORS]) + b_ref[2:3, 0:LATENT_FACTORS], 0.0)
    # ---- high_linear + relu ---------------------------------------------------
    q_high = jnp.maximum(
        jnp.dot(q_aux, w_ref[R3:R4, 0:LATENT_FACTORS]) + b_ref[3:4, 0:LATENT_FACTORS], 0.0)
    # ---- high_gate_linear + sigmoid (only column 0 of the padded gate is real)
    gate = jnp.dot(q_high, w_ref[R4:R5, 0:LATENT_FACTORS]) + b_ref[4:5, 0:LATENT_FACTORS]
    miu = jax.nn.sigmoid(gate[:, 0:1])                               # (B, 1)

    out_ref[...] = miu * q_high + (1.0 - miu) * q_aux


def _pad_cols(w, width):
    return jnp.pad(w, ((0, 0), (0, width - w.shape[1])))


def auxiliary_layer(x, params):
    """x: (B, review_length, word_dim) -> (B, latent_factors)."""
    w1, b1, w2, b2, wa, ba, wh, bh, wg, bg = params
    B = x.shape[0]

    # conv "same" padding + host-side im2col for init_conv (cheap glue)
    xp = jnp.pad(x, ((0, 0), (PAD, PAD), (0, 0)))                    # (B, L+2p, D)
    xt = jnp.concatenate(
        [xp[:, k:k + L1, :] for k in range(KERNEL_WIDTH)], axis=-1)  # (B, L1, KW*D)

    # pack the 10 tiny parameter tensors into one weight slab + one bias slab
    w1f = w1.reshape(KERNEL_WIDTH * WORD_DIM, KERNEL_NUM)
    w2f = w2.reshape(KERNEL_WIDTH * KERNEL_NUM, KERNEL_NUM)
    w_packed = jnp.concatenate(
        [_pad_cols(w1f, CW), _pad_cols(w2f, CW), _pad_cols(wa, CW),
         _pad_cols(wh, CW), _pad_cols(wg, CW)], axis=0)              # (72, CW)
    b_packed = jnp.concatenate(
        [_pad_cols(b1, CW), _pad_cols(b2, CW), _pad_cols(ba, CW),
         _pad_cols(bh, CW), _pad_cols(bg, CW),
         jnp.zeros((3, CW), jnp.float32)], axis=0)                   # (8, CW)

    # Single invocation (no grid): whole-batch blocks, one DMA per input,
    # one lane-dense (B, LATENT_FACTORS) store.
    return pl.pallas_call(
        aux_kernel,
        out_shape=jax.ShapeDtypeStruct((B, LATENT_FACTORS), jnp.float32),
    )(xt, w_packed, b_packed)


def reference(x, params):
    """Pure-JAX reference mirroring the PyTorch forward (eval mode)."""
    w1, b1, w2, b2, wa, ba, wh, bh, wg, bg = params
    dn = ("NWC", "WIO", "NWC")
    out1 = jax.lax.conv_general_dilated(x, w1, (1,), [(PAD, PAD)], dimension_numbers=dn)
    out1 = jnp.maximum(out1 + b1, 0.0)
    out2 = jax.lax.conv_general_dilated(out1, w2, (1,), [(0, 0)], dimension_numbers=dn)
    out2 = jnp.maximum(out2 + b2, 0.0)
    q_abs = jnp.max(out2, axis=1)                        # max-pool over full length + squeeze
    q_aux = jnp.maximum(q_abs @ wa + ba, 0.0)
    q_high = jnp.maximum(q_aux @ wh + bh, 0.0)
    miu = jax.nn.sigmoid(q_high @ wg + bg)
    return miu * q_high + (1.0 - miu) * q_aux


def init_params(key):
    ks = jax.random.split(key, 10)
    s = 0.1
    w1 = s * jax.random.normal(ks[0], (KERNEL_WIDTH, WORD_DIM, KERNEL_NUM), jnp.float32)
    b1 = s * jax.random.normal(ks[1], (1, KERNEL_NUM), jnp.float32)
    w2 = s * jax.random.normal(ks[2], (KERNEL_WIDTH, KERNEL_NUM, KERNEL_NUM), jnp.float32)
    b2 = s * jax.random.normal(ks[3], (1, KERNEL_NUM), jnp.float32)
    wa = s * jax.random.normal(ks[4], (KERNEL_NUM, LATENT_FACTORS), jnp.float32)
    ba = s * jax.random.normal(ks[5], (1, LATENT_FACTORS), jnp.float32)
    wh = s * jax.random.normal(ks[6], (LATENT_FACTORS, LATENT_FACTORS), jnp.float32)
    bh = s * jax.random.normal(ks[7], (1, LATENT_FACTORS), jnp.float32)
    wg = s * jax.random.normal(ks[8], (LATENT_FACTORS, 1), jnp.float32)
    bg = s * jax.random.normal(ks[9], (1, 1), jnp.float32)
    return (w1, b1, w2, b2, wa, ba, wh, bh, wg, bg)


if __name__ == "__main__":
    key = jax.random.PRNGKey(0)
    k_x, k_p = jax.random.split(key)
    x = jax.random.normal(k_x, (BATCH, REVIEW_LENGTH, WORD_DIM), jnp.float32)
    params = init_params(k_p)

    out = jax.block_until_ready(auxiliary_layer(x, params))
    ref = jax.block_until_ready(reference(x, params))

    assert out.shape == (BATCH, LATENT_FACTORS), out.shape
    np.testing.assert_allclose(np.asarray(out), np.asarray(ref), rtol=1e-4, atol=1e-4)
    print("KERNEL_OK")
</pallas_src>

<mosaic_0001>
module attributes {stable_mosaic.version = 11 : i64} {
  func.func @aux_kernel(%arg0: memref<2x16x24xf32, #tpu.memory_space<vmem>>, %arg1: memref<72x8xf32, #tpu.memory_space<vmem>>, %arg2: memref<8x8xf32, #tpu.memory_space<vmem>>, %arg3: memref<2x8xf32, #tpu.memory_space<vmem>>) attributes {dimension_semantics = [], scalar_prefetch = 0 : i64, scratch_operands = 0 : i64, tpu.core_type = #tpu.core_type<tc>} {
    %c0 = arith.constant 0 : index
    %c0_0 = arith.constant 0 : index
    %c0_1 = arith.constant 0 : index
    %0 = vector.load %arg0[%c0, %c0_0, %c0_1] : memref<2x16x24xf32, #tpu.memory_space<vmem>>, vector<2x16x24xf32>
    %1 = vector.shape_cast %0 : vector<2x16x24xf32> to vector<32x24xf32>
    %c0_2 = arith.constant 0 : index
    %c0_3 = arith.constant 0 : index
    %2 = vector.load %arg1[%c0_2, %c0_3] : memref<72x8xf32, #tpu.memory_space<vmem>>, vector<24x8xf32>
    %cst = arith.constant dense<0.000000e+00> : vector<32x8xf32>
    %3 = tpu.matmul %1, %2, %cst {dimension_numbers = #tpu.dot_dimension_numbers<[1], [0], [0], [1], [0, 0, 1, 1], [], []>} : vector<32x24xf32>, vector<24x8xf32>, vector<32x8xf32> -> vector<32x8xf32>
    %c0_4 = arith.constant 0 : index
    %c0_5 = arith.constant 0 : index
    %4 = vector.load %arg2[%c0_4, %c0_5] : memref<8x8xf32, #tpu.memory_space<vmem>>, vector<1x8xf32>
    %5 = vector.broadcast %4 : vector<1x8xf32> to vector<32x8xf32>
    %6 = arith.addf %3, %5 : vector<32x8xf32>
    %cst_6 = arith.constant 0.000000e+00 : f32
    %7 = vector.broadcast %cst_6 : f32 to vector<32x8xf32>
    %8 = arith.maximumf %6, %7 : vector<32x8xf32>
    %9 = vector.shape_cast %8 : vector<32x8xf32> to vector<2x16x8xf32>
    %cst_7 = arith.constant 0.000000e+00 : f32
    %10 = vector.broadcast %cst_7 : f32 to vector<2x2x8xf32>
    %11 = tpu.concatenate %9, %10 in 1 : vector<2x16x8xf32>, vector<2x2x8xf32> -> vector<2x18x8xf32>
    %12 = vector.extract_strided_slice %11 {offsets = [0, 0, 0], sizes = [2, 16, 8], strides = [1, 1, 1]} : vector<2x18x8xf32> to vector<2x16x8xf32>
    %13 = vector.extract_strided_slice %11 {offsets = [0, 1, 0], sizes = [2, 16, 8], strides = [1, 1, 1]} : vector<2x18x8xf32> to vector<2x16x8xf32>
    %14 = vector.extract_strided_slice %11 {offsets = [0, 2, 0], sizes = [2, 16, 8], strides = [1, 1, 1]} : vector<2x18x8xf32> to vector<2x16x8xf32>
    %15 = tpu.concatenate %12, %13, %14 in 2 : vector<2x16x8xf32>, vector<2x16x8xf32>, vector<2x16x8xf32> -> vector<2x16x24xf32>
    %16 = vector.shape_cast %15 : vector<2x16x24xf32> to vector<32x24xf32>
    %c24 = arith.constant 24 : index
    %c0_8 = arith.constant 0 : index
    %17 = vector.load %arg1[%c24, %c0_8] : memref<72x8xf32, #tpu.memory_space<vmem>>, vector<24x8xf32>
    %cst_9 = arith.constant dense<0.000000e+00> : vector<32x8xf32>
    %18 = tpu.matmul %16, %17, %cst_9 {dimension_numbers = #tpu.dot_dimension_numbers<[1], [0], [0], [1], [0, 0, 1, 1], [], []>} : vector<32x24xf32>, vector<24x8xf32>, vector<32x8xf32> -> vector<32x8xf32>
    %c1 = arith.constant 1 : index
    %c0_10 = arith.constant 0 : index
    %19 = vector.load %arg2[%c1, %c0_10] : memref<8x8xf32, #tpu.memory_space<vmem>>, vector<1x8xf32>
    %20 = vector.broadcast %19 : vector<1x8xf32> to vector<32x8xf32>
    %21 = arith.addf %18, %20 : vector<32x8xf32>
    %cst_11 = arith.constant 0.000000e+00 : f32
    %22 = vector.broadcast %cst_11 : f32 to vector<32x8xf32>
    %23 = arith.maximumf %21, %22 : vector<32x8xf32>
    %24 = vector.shape_cast %23 : vector<32x8xf32> to vector<2x16x8xf32>
    %25 = tpu.iota {dimensions = array<i32: 1>} : vector<2x16x8xi32>
    %c14_i32 = arith.constant 14 : i32
    %26 = vector.broadcast %c14_i32 : i32 to vector<2x16x8xi32>
    %27 = arith.cmpi slt, %25, %26 : vector<2x16x8xi32>
    %cst_12 = arith.constant 0.000000e+00 : f32
    %28 = vector.broadcast %cst_12 : f32 to vector<2x16x8xf32>
    %29 = arith.select %27, %24, %28 : vector<2x16x8xi1>, vector<2x16x8xf32>
    %cst_13 = arith.constant dense<0xFF800000> : vector<2x8xf32>
    %30 = vector.multi_reduction <maximumf>, %29, %cst_13 [1] : vector<2x16x8xf32> to vector<2x8xf32>
    %c48 = arith.constant 48 : index
    %c0_14 = arith.constant 0 : index
    %31 = vector.load %arg1[%c48, %c0_14] : memref<72x8xf32, #tpu.memory_space<vmem>>, vector<8x8xf32>
    %cst_15 = arith.constant dense<0.000000e+00> : vector<2x8xf32>
    %32 = tpu.matmul %30, %31, %cst_15 {dimension_numbers = #tpu.dot_dimension_numbers<[1], [0], [0], [1], [0, 0, 1, 1], [], []>} : vector<2x8xf32>, vector<8x8xf32>, vector<2x8xf32> -> vector<2x8xf32>
    %c2 = arith.constant 2 : index
    %c0_16 = arith.constant 0 : index
    %33 = vector.load %arg2[%c2, %c0_16] : memref<8x8xf32, #tpu.memory_space<vmem>>, vector<1x8xf32>
    %34 = vector.broadcast %33 : vector<1x8xf32> to vector<2x8xf32>
    %35 = arith.addf %32, %34 : vector<2x8xf32>
    %cst_17 = arith.constant 0.000000e+00 : f32
    %36 = vector.broadcast %cst_17 : f32 to vector<2x8xf32>
    %37 = arith.maximumf %35, %36 : vector<2x8xf32>
    %c56 = arith.constant 56 : index
    %c0_18 = arith.constant 0 : index
    %38 = vector.load %arg1[%c56, %c0_18] : memref<72x8xf32, #tpu.memory_space<vmem>>, vector<8x8xf32>
    %cst_19 = arith.constant dense<0.000000e+00> : vector<2x8xf32>
    %39 = tpu.matmul %37, %38, %cst_19 {dimension_numbers = #tpu.dot_dimension_numbers<[1], [0], [0], [1], [0, 0, 1, 1], [], []>} : vector<2x8xf32>, vector<8x8xf32>, vector<2x8xf32> -> vector<2x8xf32>
    %c3 = arith.constant 3 : index
    %c0_20 = arith.constant 0 : index
    %40 = vector.load %arg2[%c3, %c0_20] : memref<8x8xf32, #tpu.memory_space<vmem>>, vector<1x8xf32>
    %41 = vector.broadcast %40 : vector<1x8xf32> to vector<2x8xf32>
    %42 = arith.addf %39, %41 : vector<2x8xf32>
    %cst_21 = arith.constant 0.000000e+00 : f32
    %43 = vector.broadcast %cst_21 : f32 to vector<2x8xf32>
    %44 = arith.maximumf %42, %43 : vector<2x8xf32>
    %c64 = arith.constant 64 : index
    %c0_22 = arith.constant 0 : index
    %45 = vector.load %arg1[%c64, %c0_22] : memref<72x8xf32, #tpu.memory_space<vmem>>, vector<8x8xf32>
    %cst_23 = arith.constant dense<0.000000e+00> : vector<2x8xf32>
    %46 = tpu.matmul %44, %45, %cst_23 {dimension_numbers = #tpu.dot_dimension_numbers<[1], [0], [0], [1], [0, 0, 1, 1], [], []>} : vector<2x8xf32>, vector<8x8xf32>, vector<2x8xf32> -> vector<2x8xf32>
    %c4 = arith.constant 4 : index
    %c0_24 = arith.constant 0 : index
    %47 = vector.load %arg2[%c4, %c0_24] : memref<8x8xf32, #tpu.memory_space<vmem>>, vector<1x8xf32>
    %48 = vector.broadcast %47 : vector<1x8xf32> to vector<2x8xf32>
    %49 = arith.addf %46, %48 : vector<2x8xf32>
    %50 = vector.extract_strided_slice %49 {offsets = [0, 0], sizes = [2, 1], strides = [1, 1]} : vector<2x8xf32> to vector<2x1xf32>
    %51 = arith.negf %50 : vector<2x1xf32>
    %52 = math.exp %51 : vector<2x1xf32>
    %cst_25 = arith.constant 1.000000e+00 : f32
    %53 = vector.broadcast %cst_25 : f32 to vector<2x1xf32>
    %54 = arith.addf %53, %52 : vector<2x1xf32>
    %55 = arith.divf %53, %54 : vector<2x1xf32>
    %56 = vector.broadcast %55 : vector<2x1xf32> to vector<2x8xf32>
    %57 = arith.mulf %56, %44 : vector<2x8xf32>
    %cst_26 = arith.constant 1.000000e+00 : f32
    %58 = vector.broadcast %cst_26 : f32 to vector<2x1xf32>
    %59 = arith.subf %58, %55 : vector<2x1xf32>
    %60 = vector.broadcast %59 : vector<2x1xf32> to vector<2x8xf32>
    %61 = arith.mulf %60, %37 : vector<2x8xf32>
    %62 = arith.addf %57, %61 : vector<2x8xf32>
    %c0_27 = arith.constant 0 : index
    %c0_28 = arith.constant 0 : index
    %63 = vector.load %arg3[%c0_27, %c0_28] : memref<2x8xf32, #tpu.memory_space<vmem>>, vector<2x8xf32>
    tpu.vector_store %arg3[%c0_27, %c0_28], %62 {strides = array<i32>} : memref<2x8xf32, #tpu.memory_space<vmem>>, vector<2x8xf32>,
    return
  }
}

</mosaic_0001>

<llo_original>
// kernel: tpu_custom_call.1
$region0: #{tpu_custom_call.1}
  #allocation0 [shape = 'u32[]', space=smem, size = 0x4, offset = 0x4, fixed_abs, tag = 'smem constant byte address 0x4 - core index']
  #allocation1 [shape = 'u32[144,128]{1,0:T(1,128)}', space=vmem, size = 0x12000, scoped, tag = 'internal scratch']
  %s0 = inlined_call_operand.vmem [shape: f32[2,16,24], index: 0, kind: input, shape index: {}]
  %s1 = inlined_call_operand.vmem [shape: f32[72,8], index: 1, kind: input, shape index: {}]
  %s2 = inlined_call_operand.vmem [shape: f32[8,8], index: 2, kind: input, shape index: {}]
  %s3 = inlined_call_operand.hbm [shape: f32[2,8], index: 3, kind: output, shape index: {}]
  %s4 = sld [smem:[#allocation0]]
  $region22: #{tpu_custom_call.1} parent=0
    _
  %s6 = ssub.s32 1, %s4
  %s7 = scalar_select 0, %s6, %s4
  $region1: #{tpu_custom_call.1} parent=0
    #allocation2 [shape = 'u8[1024]{0}', space=vmem, size = 0x400, scoped, tag = 'output window, operand 0, single buffered']
    #allocation3 [shape = 's32[1]{0}', space=sflag, size = 0x4, scoped, tag = 'scoped memory for tpu_custom_call.1']
    %8 = vsyncpa [#allocation3], 0
    // Predicated region
    $region2: #{tpu_custom_call.1} parent=1 // pred_check
      _
    $region3: #{tpu_custom_call.1} parent=1 // pred_check_branch
      %10 = sbr.rel (0) target = $region5
    $region4: #{tpu_custom_call.1} parent=1 // pred_region
      _
    $region5: #{tpu_custom_call.1} parent=1 // pred_fallthru
      _
    // Predicated region
    $region6: #{tpu_custom_call.1} parent=1 // pred_check
      _
    $region7: #{tpu_custom_call.1} parent=1 // pred_check_branch
      %12 = sbr.rel (0) target = $region9
    $region8: #{tpu_custom_call.1} parent=1 // pred_region
      _
    $region9: #{tpu_custom_call.1} parent=1 // pred_fallthru
      _
    // Predicated region
    $region10: #{tpu_custom_call.1} parent=1 // pred_check
      _
    $region11: #{tpu_custom_call.1} parent=1 // pred_check_branch
      %14 = sbr.rel (0) target = $region13
    $region12: #{tpu_custom_call.1} parent=1 // pred_region
      _
    $region13: #{tpu_custom_call.1} parent=1 // pred_fallthru
      _
    %v15 = vld [vmem:[%s0] sm:$0xff]
    %v16 = vld [vmem:[%s0 + $0x8] sm:$0xff]
    %v17 = vld [vmem:[%s0 + $0x10] sm:$0xff]
    %v18 = vld [vmem:[%s0 + $0x18] sm:$0xff]
    %v19 = vld [vmem:[%s1] sm:$0xff]
    %v20 = vld [vmem:[%s1 + $0x8] sm:$0xff]
    %v21 = vld [vmem:[%s1 + $0x10] sm:$0xff]
    %v22 = vld [vmem:[%s2] sm:$0x1]
    %v23 = vlaneseq
    %v24 = vshrl.u32 %v23, 7
    %v25 = vsub.s32 0, %v24
    %v26 = vrot.slane %v22, %v25
    %vm27 = vcmask 195584
    %v29 = vsel %vm27, %v15, 0
    %v32 = vsel %vm27, %v16, 0
    %v35 = vsel %vm27, %v17, 0
    %v38 = vsel %vm27, %v18, 0
    %40 = vmatprep.subr.mxu0 0.0
    %41 = vmatpush1.msra.mxu0 %v19
    %42 = vmatprep.subr.mxu0 0.0
    %43 = vmatpush1.msra.mxu0 %v20
    %44 = vmatprep.subr.mxu0 0.0
    %45 = vmatpush1.msra.mxu0 %v21
    %46 = vmatprep.subr.mxu0 0.0
    %47 = vmatpush1.msra.mxu0 0.0
    %48 = vmatprep.subr.mxu0 0.0
    %49 = vmatpush1.msra.mxu0 0.0
    %50 = vmatprep.subr.mxu0 0.0
    %51 = vmatpush1.msra.mxu0 0.0
    %52 = vmatprep.subr.mxu0 0.0
    %53 = vmatpush1.msra.mxu0 0.0
    %54 = vmatprep.subr.mxu0 0.0
    %55 = vmatpush1.msra.mxu0 0.0
    %56 = vmatprep.subr.mxu0 0.0
    %57 = vmatpush1.msra.mxu0 0.0
    %58 = vmatprep.subr.mxu0 0.0
    %59 = vmatpush1.msra.mxu0 0.0
    %60 = vmatprep.subr.mxu0 0.0
    %61 = vmatpush1.msra.mxu0 0.0
    %62 = vmatprep.subr.mxu0 0.0
    %63 = vmatpush1.msra.mxu0 0.0
    %64 = vmatprep.subr.mxu0 0.0
    %65 = vmatpush1.msra.mxu0 0.0
    %66 = vmatprep.subr.mxu0 0.0
    %67 = vmatpush1.msra.mxu0 0.0
    %68 = vmatprep.subr.mxu0 0.0
    %69 = vmatpush1.msra.mxu0 0.0
    %70 = vmatprep.subr.mxu0 0.0
    %71 = vmatpush1.msra.mxu0 0.0
    %72 = vmatprep.subr.mxu0 0.0
    %73 = vmatpush1.msra.mxu0 0.0
    %74 = vmatprep.subr.mxu0 0.0
    %75 = vmatpush1.msra.mxu0 0.0
    %76 = vmatprep.subr.mxu0 0.0
    %77 = vmatpush1.msra.mxu0 0.0
    %78 = vmatprep.subr.mxu0 0.0
    %79 = vmatpush1.msra.mxu0 0.0
    %80 = vmatprep.subr.mxu0 0.0
    %81 = vmatpush1.msra.mxu0 0.0
    %82 = vmatprep.subr.mxu0 0.0
    %83 = vmatpush1.msra.mxu0 0.0
    %84 = vmatprep.subr.mxu0 0.0
    %85 = vmatpush1.msra.mxu0 0.0
    %86 = vmatprep.subr.mxu0 0.0
    %87 = vmatpush1.msra.mxu0 0.0
    %88 = vmatprep.subr.mxu0 0.0
    %89 = vmatpush1.msra.mxu0 0.0
    %90 = vmatprep.subr.mxu0 0.0
    %91 = vmatpush1.msra.mxu0 0.0
    %92 = vmatprep.subr.mxu0 0.0
    %93 = vmatpush1.msra.mxu0 0.0
    %94 = vmatprep.subr.mxu0 0.0
    %95 = vmatpush1.msra.mxu0 0.0
    %96 = vmatprep.subr.mxu0 0.0
    %97 = vmatpush1.msra.mxu0 0.0
    %98 = vmatprep.subr.mxu0 0.0
    %99 = vmatpush1.msra.mxu0 0.0
    %100 = vmatprep.subr.mxu0 0.0
    %101 = vmatpush1.msra.mxu0 0.0
    %102 = vmatprep.subr.mxu0 0.0
    %103 = vmatpush1.msra.mxu0 0.0
    %104 = vmatprep.mubr.f32.mxu0 0.0
    %105 = vmatmul.mubr.f32.gmra.mrb[0].mxu0 %v29
    %v106 = vpop.f32.mrb[0].mxu0
    %v107 = vadd.f32 %v26, %v106
    %v108 = vpop.f32.mrb[0].mxu0
    %109 = vmatprep.mubr.f32.mxu0 0.0
    %110 = vmatmul.mubr.f32.gmra.mrb[0].mxu0 %v32
    %v111 = vpop.f32.mrb[0].mxu0
    %v112 = vadd.f32 %v26, %v111
    %v113 = vpop.f32.mrb[0].mxu0
    %114 = vmatprep.mubr.f32.mxu0 0.0
    %115 = vmatmul.mubr.f32.gmra.mrb[0].mxu0 %v35
    %v116 = vpop.f32.mrb[0].mxu0
    %v117 = vadd.f32 %v26, %v116
    %v118 = vpop.f32.mrb[0].mxu0
    %119 = vmatprep.mubr.f32.mxu0 0.0
    %120 = vmatmul.mubr.f32.gmra.mrb[0].mxu0 %v38
    %v121 = vpop.f32.mrb[0].mxu0
    %v122 = vadd.f32 %v26, %v121
    %v123 = vpop.f32.mrb[0].mxu0
    %124 = vdwg.mxu0
    %v125 = vmax.f32 %v107, 0.0
    %v126 = vmax.f32 %v112, 0.0
    %v127 = vmax.f32 %v117, 0.0
    %v128 = vmax.f32 %v122, 0.0
    %vm134 = vcmask 1046528
    %v135 = vrot.slane %v125, 1
    %v136 = vrot.slane %v126, 1
    %v137 = vsel %vm134, %v135, %v136
    %v138 = vrot.slane 0.0, 1
    %v139 = vsel %vm134, %v136, %v138
    %v140 = vrot.slane %v127, 1
    %v141 = vrot.slane %v128, 1
    %v142 = vsel %vm134, %v140, %v141
    %v143 = vsel %vm134, %v141, %v138
    %144 = vrot.lane.b32.xlu0 %v137, 8
    %v145 = vpop.permute.xlu0 %144
    %146 = vrot.lane.b32.xlu0 %v139, 8
    %v147 = vpop.permute.xlu0 %146
    %148 = vrot.lane.b32.xlu0 %v142, 8
    %v149 = vpop.permute.xlu0 %148
    %150 = vrot.lane.b32.xlu0 %v143, 8
    %v151 = vpop.permute.xlu0 %150
    %vm156 = vcmask 1045504
    %v157 = vrot.slane %v125, 2
    %v158 = vrot.slane %v126, 2
    %v159 = vsel %vm156, %v157, %v158
    %v160 = vrot.slane 0.0, 2
    %v161 = vsel %vm156, %v158, %v160
    %v162 = vrot.slane %v127, 2
    %v163 = vrot.slane %v128, 2
    %v164 = vsel %vm156, %v162, %v163
    %v165 = vsel %vm156, %v163, %v160
    %166 = vrot.lane.b32.xlu0 %v159, 16
    %v167 = vpop.permute.xlu0 %166
    %168 = vrot.lane.b32.xlu0 %v161, 16
    %v169 = vpop.permute.xlu0 %168
    %170 = vrot.lane.b32.xlu0 %v164, 16
    %v171 = vpop.permute.xlu0 %170
    %172 = vrot.lane.b32.xlu0 %v165, 16
    %v173 = vpop.permute.xlu0 %172
    %vm178 = vcmask 64512
    %v179 = vsel %vm178, %v125, %v145
    %v180 = vsel %vm178, %v126, %v147
    %v181 = vsel %vm178, %v127, %v149
    %v182 = vsel %vm178, %v128, %v151
    %vm183 = vcmask 130048
    %v184 = vsel %vm183, %v179, %v167
    %v185 = vsel %vm183, %v180, %v169
    %v186 = vsel %vm183, %v181, %v171
    %v187 = vsel %vm183, %v182, %v173
    %v188 = vld [vmem:[%s1 + $0x18] sm:$0xff]
    %v189 = vld [vmem:[%s1 + $0x20] sm:$0xff]
    %v190 = vld [vmem:[%s1 + $0x28] sm:$0xff]
    %v191 = vld [vmem:[%s2 + $0x1] sm:$0x1]
    %v192 = vlaneseq
    %v193 = vshrl.u32 %v192, 7
    %v194 = vsub.s32 0, %v193
    %v195 = vrot.slane %v191, %v194
    %v197 = vsel %vm27, %v184, 0
    %v200 = vsel %vm27, %v185, 0
    %v203 = vsel %vm27, %v186, 0
    %v206 = vsel %vm27, %v187, 0
    %208 = vmatprep.subr.mxu0 0.0
    %209 = vmatpush1.msra.mxu0 %v188
    %210 = vmatprep.subr.mxu0 0.0
    %211 = vmatpush1.msra.mxu0 %v189
    %212 = vmatprep.subr.mxu0 0.0
    %213 = vmatpush1.msra.mxu0 %v190
    %214 = vmatprep.subr.mxu0 0.0
    %215 = vmatpush1.msra.mxu0 0.0
    %216 = vmatprep.subr.mxu0 0.0
    %217 = vmatpush1.msra.mxu0 0.0
    %218 = vmatprep.subr.mxu0 0.0
    %219 = vmatpush1.msra.mxu0 0.0
    %220 = vmatprep.subr.mxu0 0.0
    %221 = vmatpush1.msra.mxu0 0.0
    %222 = vmatprep.subr.mxu0 0.0
    %223 = vmatpush1.msra.mxu0 0.0
    %224 = vmatprep.subr.mxu0 0.0
    %225 = vmatpush1.msra.mxu0 0.0
    %226 = vmatprep.subr.mxu0 0.0
    %227 = vmatpush1.msra.mxu0 0.0
    %228 = vmatprep.subr.mxu0 0.0
    %229 = vmatpush1.msra.mxu0 0.0
    %230 = vmatprep.subr.mxu0 0.0
    %231 = vmatpush1.msra.mxu0 0.0
    %232 = vmatprep.subr.mxu0 0.0
    %233 = vmatpush1.msra.mxu0 0.0
    %234 = vmatprep.subr.mxu0 0.0
    %235 = vmatpush1.msra.mxu0 0.0
    %236 = vmatprep.subr.mxu0 0.0
    %237 = vmatpush1.msra.mxu0 0.0
    %238 = vmatprep.subr.mxu0 0.0
    %239 = vmatpush1.msra.mxu0 0.0
    %240 = vmatprep.subr.mxu0 0.0
    %241 = vmatpush1.msra.mxu0 0.0
    %242 = vmatprep.subr.mxu0 0.0
    %243 = vmatpush1.msra.mxu0 0.0
    %244 = vmatprep.subr.mxu0 0.0
    %245 = vmatpush1.msra.mxu0 0.0
    %246 = vmatprep.subr.mxu0 0.0
    %247 = vmatpush1.msra.mxu0 0.0
    %248 = vmatprep.subr.mxu0 0.0
    %249 = vmatpush1.msra.mxu0 0.0
    %250 = vmatprep.subr.mxu0 0.0
    %251 = vmatpush1.msra.mxu0 0.0
    %252 = vmatprep.subr.mxu0 0.0
    %253 = vmatpush1.msra.mxu0 0.0
    %254 = vmatprep.subr.mxu0 0.0
    %255 = vmatpush1.msra.mxu0 0.0
    %256 = vmatprep.subr.mxu0 0.0
    %257 = vmatpush1.msra.mxu0 0.0
    %258 = vmatprep.subr.mxu0 0.0
    %259 = vmatpush1.msra.mxu0 0.0
    %260 = vmatprep.subr.mxu0 0.0
    %261 = vmatpush1.msra.mxu0 0.0
    %262 = vmatprep.subr.mxu0 0.0
    %263 = vmatpush1.msra.mxu0 0.0
    %264 = vmatprep.subr.mxu0 0.0
    %265 = vmatpush1.msra.mxu0 0.0
    %266 = vmatprep.subr.mxu0 0.0
    %267 = vmatpush1.msra.mxu0 0.0
    %268 = vmatprep.subr.mxu0 0.0
    %269 = vmatpush1.msra.mxu0 0.0
    %270 = vmatprep.subr.mxu0 0.0
    %271 = vmatpush1.msra.mxu0 0.0
    %272 = vmatprep.mubr.f32.mxu0 0.0
    %273 = vmatmul.mubr.f32.gmra.mrb[0].mxu0 %v197
    %v274 = vpop.f32.mrb[0].mxu0
    %v275 = vadd.f32 %v195, %v274
    %v276 = vpop.f32.mrb[0].mxu0
    %277 = vmatprep.mubr.f32.mxu0 0.0
    %278 = vmatmul.mubr.f32.gmra.mrb[0].mxu0 %v200
    %v279 = vpop.f32.mrb[0].mxu0
    %v280 = vadd.f32 %v195, %v279
    %v281 = vpop.f32.mrb[0].mxu0
    %282 = vmatprep.mubr.f32.mxu0 0.0
    %283 = vmatmul.mubr.f32.gmra.mrb[0].mxu0 %v203
    %v284 = vpop.f32.mrb[0].mxu0
    %v285 = vadd.f32 %v195, %v284
    %v286 = vpop.f32.mrb[0].mxu0
    %287 = vmatprep.mubr.f32.mxu0 0.0
    %288 = vmatmul.mubr.f32.gmra.mrb[0].mxu0 %v206
    %v289 = vpop.f32.mrb[0].mxu0
    %v290 = vadd.f32 %v195, %v289
    %v291 = vpop.f32.mrb[0].mxu0
    %292 = vdwg.mxu0
    %v293 = vmax.f32 %v275, 0.0
    %v294 = vmax.f32 %v280, 0.0
    %v295 = vmax.f32 %v285, 0.0
    %v296 = vmax.f32 %v290, 0.0
    %v297 = vlaneseq
    %v298 = vshrl.u32 %v297, 7
    %v299 = vadd.s32 %v298, 8
    %vm300 = vcmp.lt.s32.totalorder %v298, 14
    %vm301 = vcmp.lt.s32.totalorder %v299, 14
    %v302 = vsel %vm300, %v293, 0.0
    %v303 = vsel %vm301, %v294, 0.0
    %v304 = vsel %vm300, %v295, 0.0
    %v305 = vsel %vm301, %v296, 0.0
    %v306 = vsel %vm178, %v302, -inf
    %v307 = vsel %vm178, %v303, -inf
    %v308 = vmax.f32 %v306, %v307
    %v309 = vrot.slane %v308, 4
    %v310 = vmax.f32 %v308, %v309
    %v311 = vrot.slane %v310, 2
    %v312 = vmax.f32 %v310, %v311
    %v313 = vrot.slane %v312, 1
    %v314 = vmax.f32 %v312, %v313
    %v315 = vsel %vm178, %v304, -inf
    %v316 = vsel %vm178, %v305, -inf
    %v317 = vmax.f32 %v315, %v316
    %v318 = vrot.slane %v317, 4
    %v319 = vmax.f32 %v317, %v318
    %v320 = vrot.slane %v319, 2
    %v321 = vmax.f32 %v319, %v320
    %v322 = vrot.slane %v321, 1
    %v323 = vmax.f32 %v321, %v322
    %v324 = vld [vmem:[%s1 + $0x30] sm:$0xff]
    %v325 = vld [vmem:[%s2 + $0x2] sm:$0x1]
    %v326 = vlaneseq
    %v327 = vshrl.u32 %v326, 7
    %v328 = vsub.s32 0, %v327
    %v329 = vrot.slane %v325, %v328
    %vm332 = vcmask 1041409
    %v333 = vsel %vm332, %v323, %v314
    %v334 = vsel %vm178, %v333, 0
    %336 = vmatprep.subr.mxu0 0.0
    %337 = vmatpush1.msra.mxu0 %v324
    %338 = vmatprep.subr.mxu0 0.0
    %339 = vmatpush1.msra.mxu0 0.0
    %340 = vmatprep.subr.mxu0 0.0
    %341 = vmatpush1.msra.mxu0 0.0
    %342 = vmatprep.subr.mxu0 0.0
    %343 = vmatpush1.msra.mxu0 0.0
    %344 = vmatprep.subr.mxu0 0.0
    %345 = vmatpush1.msra.mxu0 0.0
    %346 = vmatprep.subr.mxu0 0.0
    %347 = vmatpush1.msra.mxu0 0.0
    %348 = vmatprep.subr.mxu0 0.0
    %349 = vmatpush1.msra.mxu0 0.0
    %350 = vmatprep.subr.mxu0 0.0
    %351 = vmatpush1.msra.mxu0 0.0
    %352 = vmatprep.subr.mxu0 0.0
    %353 = vmatpush1.msra.mxu0 0.0
    %354 = vmatprep.subr.mxu0 0.0
    %355 = vmatpush1.msra.mxu0 0.0
    %356 = vmatprep.subr.mxu0 0.0
    %357 = vmatpush1.msra.mxu0 0.0
    %358 = vmatprep.subr.mxu0 0.0
    %359 = vmatpush1.msra.mxu0 0.0
    %360 = vmatprep.subr.mxu0 0.0
    %361 = vmatpush1.msra.mxu0 0.0
    %362 = vmatprep.subr.mxu0 0.0
    %363 = vmatpush1.msra.mxu0 0.0
    %364 = vmatprep.subr.mxu0 0.0
    %365 = vmatpush1.msra.mxu0 0.0
    %366 = vmatprep.subr.mxu0 0.0
    %367 = vmatpush1.msra.mxu0 0.0
    %368 = vmatprep.subr.mxu0 0.0
    %369 = vmatpush1.msra.mxu0 0.0
    %370 = vmatprep.subr.mxu0 0.0
    %371 = vmatpush1.msra.mxu0 0.0
    %372 = vmatprep.subr.mxu0 0.0
    %373 = vmatpush1.msra.mxu0 0.0
    %374 = vmatprep.subr.mxu0 0.0
    %375 = vmatpush1.msra.mxu0 0.0
    %376 = vmatprep.subr.mxu0 0.0
    %377 = vmatpush1.msra.mxu0 0.0
    %378 = vmatprep.subr.mxu0 0.0
    %379 = vmatpush1.msra.mxu0 0.0
    %380 = vmatprep.subr.mxu0 0.0
    %381 = vmatpush1.msra.mxu0 0.0
    %382 = vmatprep.subr.mxu0 0.0
    %383 = vmatpush1.msra.mxu0 0.0
    %384 = vmatprep.subr.mxu0 0.0
    %385 = vmatpush1.msra.mxu0 0.0
    %386 = vmatprep.subr.mxu0 0.0
    %387 = vmatpush1.msra.mxu0 0.0
    %388 = vmatprep.subr.mxu0 0.0
    %389 = vmatpush1.msra.mxu0 0.0
    %390 = vmatprep.subr.mxu0 0.0
    %391 = vmatpush1.msra.mxu0 0.0
    %392 = vmatprep.subr.mxu0 0.0
    %393 = vmatpush1.msra.mxu0 0.0
    %394 = vmatprep.subr.mxu0 0.0
    %395 = vmatpush1.msra.mxu0 0.0
    %396 = vmatprep.subr.mxu0 0.0
    %397 = vmatpush1.msra.mxu0 0.0
    %398 = vmatprep.subr.mxu0 0.0
    %399 = vmatpush1.msra.mxu0 0.0
    %400 = vmatprep.mubr.f32.mxu0 0.0
    %401 = vmatmul.mubr.f32.gmra.mrb[0].mxu0 %v334
    %v402 = vpop.f32.mrb[0].mxu0
    %v403 = vadd.f32 %v329, %v402
    %v404 = vpop.f32.mrb[0].mxu0
    %405 = vdwg.mxu0
    %v406 = vmax.f32 %v403, 0.0
    %v407 = vld [vmem:[%s1 + $0x38] sm:$0xff]
    %v408 = vld [vmem:[%s2 + $0x3] sm:$0x1]
    %v409 = vlaneseq
    %v410 = vshrl.u32 %v409, 7
    %v411 = vsub.s32 0, %v410
    %v412 = vrot.slane %v408, %v411
    %v414 = vsel %vm178, %v406, 0
    %416 = vmatprep.subr.mxu0 0.0
    %417 = vmatpush1.msra.mxu0 %v407
    %418 = vmatprep.subr.mxu0 0.0
    %419 = vmatpush1.msra.mxu0 0.0
    %420 = vmatprep.subr.mxu0 0.0
    %421 = vmatpush1.msra.mxu0 0.0
    %422 = vmatprep.subr.mxu0 0.0
    %423 = vmatpush1.msra.mxu0 0.0
    %424 = vmatprep.subr.mxu0 0.0
    %425 = vmatpush1.msra.mxu0 0.0
    %426 = vmatprep.subr.mxu0 0.0
    %427 = vmatpush1.msra.mxu0 0.0
    %428 = vmatprep.subr.mxu0 0.0
    %429 = vmatpush1.msra.mxu0 0.0
    %430 = vmatprep.subr.mxu0 0.0
    %431 = vmatpush1.msra.mxu0 0.0
    %432 = vmatprep.subr.mxu0 0.0
    %433 = vmatpush1.msra.mxu0 0.0
    %434 = vmatprep.subr.mxu0 0.0
    %435 = vmatpush1.msra.mxu0 0.0
    %436 = vmatprep.subr.mxu0 0.0
    %437 = vmatpush1.msra.mxu0 0.0
    %438 = vmatprep.subr.mxu0 0.0
    %439 = vmatpush1.msra.mxu0 0.0
    %440 = vmatprep.subr.mxu0 0.0
    %441 = vmatpush1.msra.mxu0 0.0
    %442 = vmatprep.subr.mxu0 0.0
    %443 = vmatpush1.msra.mxu0 0.0
    %444 = vmatprep.subr.mxu0 0.0
    %445 = vmatpush1.msra.mxu0 0.0
    %446 = vmatprep.subr.mxu0 0.0
    %447 = vmatpush1.msra.mxu0 0.0
    %448 = vmatprep.subr.mxu0 0.0
    %449 = vmatpush1.msra.mxu0 0.0
    %450 = vmatprep.subr.mxu0 0.0
    %451 = vmatpush1.msra.mxu0 0.0
    %452 = vmatprep.subr.mxu0 0.0
    %453 = vmatpush1.msra.mxu0 0.0
    %454 = vmatprep.subr.mxu0 0.0
    %455 = vmatpush1.msra.mxu0 0.0
    %456 = vmatprep.subr.mxu0 0.0
    %457 = vmatpush1.msra.mxu0 0.0
    %458 = vmatprep.subr.mxu0 0.0
    %459 = vmatpush1.msra.mxu0 0.0
    %460 = vmatprep.subr.mxu0 0.0
    %461 = vmatpush1.msra.mxu0 0.0
    %462 = vmatprep.subr.mxu0 0.0
    %463 = vmatpush1.msra.mxu0 0.0
    %464 = vmatprep.subr.mxu0 0.0
    %465 = vmatpush1.msra.mxu0 0.0
    %466 = vmatprep.subr.mxu0 0.0
    %467 = vmatpush1.msra.mxu0 0.0
    %468 = vmatprep.subr.mxu0 0.0
    %469 = vmatpush1.msra.mxu0 0.0
    %470 = vmatprep.subr.mxu0 0.0
    %471 = vmatpush1.msra.mxu0 0.0
    %472 = vmatprep.subr.mxu0 0.0
    %473 = vmatpush1.msra.mxu0 0.0
    %474 = vmatprep.subr.mxu0 0.0
    %475 = vmatpush1.msra.mxu0 0.0
    %476 = vmatprep.subr.mxu0 0.0
    %477 = vmatpush1.msra.mxu0 0.0
    %478 = vmatprep.subr.mxu0 0.0
    %479 = vmatpush1.msra.mxu0 0.0
    %480 = vmatprep.mubr.f32.mxu0 0.0
    %481 = vmatmul.mubr.f32.gmra.mrb[0].mxu0 %v414
    %v482 = vpop.f32.mrb[0].mxu0
    %v483 = vadd.f32 %v412, %v482
    %v484 = vpop.f32.mrb[0].mxu0
    %485 = vdwg.mxu0
    %v486 = vmax.f32 %v483, 0.0
    %v487 = vld [vmem:[%s1 + $0x40] sm:$0xff]
    %v488 = vld [vmem:[%s2 + $0x4] sm:$0x1]
    %v489 = vlaneseq
    %v490 = vshrl.u32 %v489, 7
    %v491 = vsub.s32 0, %v490
    %v492 = vrot.slane %v488, %v491
    %v494 = vsel %vm178, %v486, 0
    %496 = vmatprep.subr.mxu0 0.0
    %497 = vmatpush1.msra.mxu0 %v487
    %498 = vmatprep.subr.mxu0 0.0
    %499 = vmatpush1.msra.mxu0 0.0
    %500 = vmatprep.subr.mxu0 0.0
    %501 = vmatpush1.msra.mxu0 0.0
    %502 = vmatprep.subr.mxu0 0.0
    %503 = vmatpush1.msra.mxu0 0.0
    %504 = vmatprep.subr.mxu0 0.0
    %505 = vmatpush1.msra.mxu0 0.0
    %506 = vmatprep.subr.mxu0 0.0
    %507 = vmatpush1.msra.mxu0 0.0
    %508 = vmatprep.subr.mxu0 0.0
    %509 = vmatpush1.msra.mxu0 0.0
    %510 = vmatprep.subr.mxu0 0.0
    %511 = vmatpush1.msra.mxu0 0.0
    %512 = vmatprep.subr.mxu0 0.0
    %513 = vmatpush1.msra.mxu0 0.0
    %514 = vmatprep.subr.mxu0 0.0
    %515 = vmatpush1.msra.mxu0 0.0
    %516 = vmatprep.subr.mxu0 0.0
    %517 = vmatpush1.msra.mxu0 0.0
    %518 = vmatprep.subr.mxu0 0.0
    %519 = vmatpush1.msra.mxu0 0.0
    %520 = vmatprep.subr.mxu0 0.0
    %521 = vmatpush1.msra.mxu0 0.0
    %522 = vmatprep.subr.mxu0 0.0
    %523 = vmatpush1.msra.mxu0 0.0
    %524 = vmatprep.subr.mxu0 0.0
    %525 = vmatpush1.msra.mxu0 0.0
    %526 = vmatprep.subr.mxu0 0.0
    %527 = vmatpush1.msra.mxu0 0.0
    %528 = vmatprep.subr.mxu0 0.0
    %529 = vmatpush1.msra.mxu0 0.0
    %530 = vmatprep.subr.mxu0 0.0
    %531 = vmatpush1.msra.mxu0 0.0
    %532 = vmatprep.subr.mxu0 0.0
    %533 = vmatpush1.msra.mxu0 0.0
    %534 = vmatprep.subr.mxu0 0.0
    %535 = vmatpush1.msra.mxu0 0.0
    %536 = vmatprep.subr.mxu0 0.0
    %537 = vmatpush1.msra.mxu0 0.0
    %538 = vmatprep.subr.mxu0 0.0
    %539 = vmatpush1.msra.mxu0 0.0
    %540 = vmatprep.subr.mxu0 0.0
    %541 = vmatpush1.msra.mxu0 0.0
    %542 = vmatprep.subr.mxu0 0.0
    %543 = vmatpush1.msra.mxu0 0.0
    %544 = vmatprep.subr.mxu0 0.0
    %545 = vmatpush1.msra.mxu0 0.0
    %546 = vmatprep.subr.mxu0 0.0
    %547 = vmatpush1.msra.mxu0 0.0
    %548 = vmatprep.subr.mxu0 0.0
    %549 = vmatpush1.msra.mxu0 0.0
    %550 = vmatprep.subr.mxu0 0.0
    %551 = vmatpush1.msra.mxu0 0.0
    %552 = vmatprep.subr.mxu0 0.0
    %553 = vmatpush1.msra.mxu0 0.0
    %554 = vmatprep.subr.mxu0 0.0
    %555 = vmatpush1.msra.mxu0 0.0
    %556 = vmatprep.subr.mxu0 0.0
    %557 = vmatpush1.msra.mxu0 0.0
    %558 = vmatprep.subr.mxu0 0.0
    %559 = vmatpush1.msra.mxu0 0.0
    %560 = vmatprep.mubr.f32.mxu0 0.0
    %561 = vmatmul.mubr.f32.gmra.mrb[0].mxu0 %v494
    %v562 = vpop.f32.mrb[0].mxu0
    %v563 = vadd.f32 %v492, %v562
    %v564 = vpop.f32.mrb[0].mxu0
    %565 = vdwg.mxu0
    %v566 = vxor.u32 %v563, 2147483648
    %v567 = vmul.f32 %v566, 1.442695
    %v568 = vpow.pop %v567
    %v569 = vadd.f32 %v568, 1.0
    %v570 = vrcp.pop %v569
    %v571 = vmul.f32 1.0, %v570
    %573 = vset.pattern.permute.xlu0 0
    %574 = vperm.xlu0 %573, %v571
    %v575 = vpop.permute.xlu0 %574
    %v577 = vmul.f32 %v575, %v486
    %v578 = vsub.f32 1.0, %v571
    %580 = vset.pattern.permute.xlu0 0
    %581 = vperm.xlu0 %580, %v578
    %v582 = vpop.permute.xlu0 %581
    %v584 = vmul.f32 %v582, %v406
    %v585 = vadd.f32 %v577, %v584
    %vm586 = vcmask 58368
    %587 = vst.msk [vmem:[#allocation2] sm:$0x3] %vm586, %v585
    // Predicated region
    $region14: #{tpu_custom_call.1} parent=1 // pred_check
      _
    $region15: #{tpu_custom_call.1} parent=1 // pred_check_branch
      %589 = sbr.rel (0) target = $region17
    $region16: #{tpu_custom_call.1} parent=1 // pred_region
      %s591 = ssub.s32 32, 32
      %592 = vsyncadd [#allocation3], %s591
      %s594 = sshll.u32 [#allocation2], 4
      %s595 = int_to_ptr.vmem [resolvable:$true] %s594
      %597 = dma.vmem_to_hbm [thread:$0]  %s595, 32, %s3, [#allocation3]
    $region17: #{tpu_custom_call.1} parent=1 // pred_fallthru
      _
    // Predicated region
    $region18: #{tpu_custom_call.1} parent=1 // pred_check
      _
    $region19: #{tpu_custom_call.1} parent=1 // pred_check_branch
      %599 = sbr.rel (0) target = $region21
    $region20: #{tpu_custom_call.1} parent=1 // pred_region
      %600 = dma.done [#allocation3], 32
    $region21: #{tpu_custom_call.1} parent=1 // pred_fallthru
      _
    %601 = vsyncpa [#allocation3], 1

</llo_original>
